<compile_context>
chip_gen: v7x
topology: tpu7x:2x2x1
jax: 0.10.0
libtpu: 0.0.40
codegen_flags: <defaults>
</compile_context>

<pallas_src>
import numpy as np
import jax
import jax.numpy as jnp
from jax import lax
from jax.experimental import pallas as pl
from jax.experimental.pallas import tpu as pltpu

LN_EPS = 1e-5

# Target ~2 MiB per x tile => double-buffered in + out stays well under the
# 32 MiB scoped-VMEM default (and well under v7x's 64 MiB physical VMEM).
_TILE_BYTES_TARGET = 2 * 1024 * 1024


def _pick_seq_tile(S: int, D: int, itemsize: int, max_seq_tile: int) -> int:
    """Largest sequence tile that divides S, is a multiple of 8 (sublane),
    and keeps the x tile under the VMEM byte target."""
    cap = max(8, min(max_seq_tile, _TILE_BYTES_TARGET // max(1, D * itemsize)))
    if S <= cap:
        return S  # full-extent block is always layout-legal
    for cand in range(min(S, cap), 7, -1):
        if S % cand == 0 and cand % 8 == 0:
            return cand
    return S  # no clean divisor -> fall back to whole sequence


def adaln_kernel(x_ref, gmod_ref, bmod_ref, o_ref):
    # x_ref / o_ref: (tS, D)     gmod_ref / bmod_ref: (1, D)
    x = x_ref[...].astype(jnp.float32)

    # LayerNorm statistics over the feature (lane) dim, in f32.
    mean = jnp.mean(x, axis=-1, keepdims=True)
    xc = x - mean
    var = jnp.mean(xc * xc, axis=-1, keepdims=True)
    inv = lax.rsqrt(var + LN_EPS)

    # Folded affine: gmod = ln_w*(1+alpha), bmod = ln_b*(1+alpha)+beta.
    o_ref[...] = (xc * inv * gmod_ref[...] + bmod_ref[...]).astype(o_ref.dtype)


def adaptive_layer_norm_1d(x, t, params, *, max_seq_tile: int = 512):
    """x: (B, S, D), t: (B, C). Returns (B, S, D) in x.dtype."""
    B, S, D = x.shape

    # --- Tiny conditioning GEMV + constant folding, in plain XLA (hoisted) ---
    ab = (jnp.dot(t.astype(jnp.float32), params["linear_w"].astype(jnp.float32))
          + params["linear_b"].astype(jnp.float32))                    # (B, 2D)
    alpha, beta = ab[:, :D], ab[:, D:]
    scale = 1.0 + alpha                                                 # (B, D)
    gmod = (params["ln_w"][None, :].astype(jnp.float32) * scale)        # (B, D)
    bmod = (params["ln_b"][None, :].astype(jnp.float32) * scale + beta)  # (B, D)
    gmod = gmod.reshape(B, 1, D)
    bmod = bmod.reshape(B, 1, D)

    tS = _pick_seq_tile(S, D, jnp.dtype(x.dtype).itemsize, max_seq_tile)
    grid = (B, S // tS)

    grid_spec = pltpu.PrefetchScalarGridSpec(
        num_scalar_prefetch=0,
        grid=grid,
        in_specs=[
            # x: batch dim squeezed, (tS, D) tiles streamed over the sequence.
            pl.BlockSpec((None, tS, D), lambda b, s: (b, s, 0)),
            # Per-batch folded modulation vectors, resident across S tiles.
            pl.BlockSpec((None, 1, D), lambda b, s: (b, 0, 0)),
            pl.BlockSpec((None, 1, D), lambda b, s: (b, 0, 0)),
        ],
        out_specs=pl.BlockSpec((None, tS, D), lambda b, s: (b, s, 0)),
    )

    return pl.pallas_call(
        adaln_kernel,
        out_shape=jax.ShapeDtypeStruct((B, S, D), x.dtype),
        grid_spec=grid_spec,
        compiler_params=pltpu.CompilerParams(
            dimension_semantics=("parallel", "parallel")),
    )(x, gmod, bmod)


def reference(x, t, params):
    D = x.shape[-1]
    mean = jnp.mean(x, axis=-1, keepdims=True)
    var = jnp.mean((x - mean) ** 2, axis=-1, keepdims=True)
    xn = (x - mean) * lax.rsqrt(var + LN_EPS) * params["ln_w"] + params["ln_b"]
    ab = t @ params["linear_w"] + params["linear_b"]
    alpha, beta = ab[:, :D], ab[:, D:]
    return xn * (1.0 + alpha[:, None, :]) + beta[:, None, :]


if __name__ == "__main__":
    # batch, seq, data_dim, norm_cond_dim.  D = 128 keeps the output lane-dense;
    # max_seq_tile=8 forces the multi-tile (grid=(B, S//tS)=(2,4)) path even at
    # this small size.
    B, S, D, C = 2, 32, 128, 16

    key = jax.random.PRNGKey(0)
    kx, kt, kw, kb, kg, kbl = jax.random.split(key, 6)

    x = jax.random.normal(kx, (B, S, D), dtype=jnp.float32)
    t = jax.random.normal(kt, (B, C), dtype=jnp.float32)

    # Module __init__ zero-inits the linear and uses default LayerNorm affine
    # (ones/zeros).  Use small deterministic non-zero params so the full path
    # (conditioning + modulation) is actually exercised.
    params = {
        "linear_w": 0.1 * jax.random.normal(kw, (C, 2 * D), dtype=jnp.float32),
        "linear_b": 0.1 * jax.random.normal(kb, (2 * D,), dtype=jnp.float32),
        "ln_w": 1.0 + 0.05 * jax.random.normal(kg, (D,), dtype=jnp.float32),
        "ln_b": 0.05 * jax.random.normal(kbl, (D,), dtype=jnp.float32),
    }

    out = adaptive_layer_norm_1d(x, t, params, max_seq_tile=8)
    out = jax.block_until_ready(out)

    ref = reference(x, t, params)
    np.testing.assert_allclose(np.asarray(out), np.asarray(ref), rtol=1e-5, atol=1e-5)
    print("KERNEL_OK")
</pallas_src>

<mosaic_0001>
module attributes {stable_mosaic.version = 11 : i64} {
  func.func @adaln_kernel(%arg0: i32, %arg1: i32, %arg2: memref<1x8x128xf32, #tpu.memory_space<vmem>>, %arg3: memref<1x1x128xf32, #tpu.memory_space<vmem>>, %arg4: memref<1x1x128xf32, #tpu.memory_space<vmem>>, %arg5: memref<1x8x128xf32, #tpu.memory_space<vmem>>) attributes {dimension_semantics = [#tpu.dimension_semantics<parallel>, #tpu.dimension_semantics<parallel>], iteration_bounds = array<i64: 2, 4>, scalar_prefetch = 0 : i64, scratch_operands = 0 : i64, tpu.core_type = #tpu.core_type<tc>, window_params = [{transform_indices = @transform_0, window_bounds = array<i64: 1, 8, 128>}, {transform_indices = @transform_1, window_bounds = array<i64: 1, 1, 128>}, {transform_indices = @transform_2, window_bounds = array<i64: 1, 1, 128>}, {transform_indices = @transform_3, window_bounds = array<i64: 1, 8, 128>}]} {
    %c0 = arith.constant 0 : index
    %c0_0 = arith.constant 0 : index
    %c0_1 = arith.constant 0 : index
    %0 = vector.load %arg2[%c0, %c0_0, %c0_1] : memref<1x8x128xf32, #tpu.memory_space<vmem>>, vector<1x8x128xf32>
    %1 = vector.shape_cast %0 : vector<1x8x128xf32> to vector<8x128xf32>
    %cst = arith.constant dense<0.000000e+00> : vector<8xf32>
    %2 = vector.multi_reduction <add>, %1, %cst [1] : vector<8x128xf32> to vector<8xf32>
    %3 = vector.shape_cast %2 : vector<8xf32> to vector<8x1xf32>
    %cst_2 = arith.constant 1.280000e+02 : f32
    %4 = vector.broadcast %cst_2 : f32 to vector<8x1xf32>
    %5 = arith.divf %3, %4 : vector<8x1xf32>
    %6 = vector.broadcast %5 : vector<8x1xf32> to vector<8x128xf32>
    %7 = arith.subf %1, %6 : vector<8x128xf32>
    %8 = arith.mulf %7, %7 : vector<8x128xf32>
    %cst_3 = arith.constant dense<0.000000e+00> : vector<8xf32>
    %9 = vector.multi_reduction <add>, %8, %cst_3 [1] : vector<8x128xf32> to vector<8xf32>
    %10 = vector.shape_cast %9 : vector<8xf32> to vector<8x1xf32>
    %cst_4 = arith.constant 1.280000e+02 : f32
    %11 = vector.broadcast %cst_4 : f32 to vector<8x1xf32>
    %12 = arith.divf %10, %11 : vector<8x1xf32>
    %cst_5 = arith.constant 9.99999974E-6 : f32
    %13 = vector.broadcast %cst_5 : f32 to vector<8x1xf32>
    %14 = arith.addf %12, %13 : vector<8x1xf32>
    %15 = math.rsqrt %14 : vector<8x1xf32>
    %16 = vector.broadcast %15 : vector<8x1xf32> to vector<8x128xf32>
    %17 = arith.mulf %7, %16 : vector<8x128xf32>
    %c0_6 = arith.constant 0 : index
    %c0_7 = arith.constant 0 : index
    %c0_8 = arith.constant 0 : index
    %18 = vector.load %arg3[%c0_6, %c0_7, %c0_8] : memref<1x1x128xf32, #tpu.memory_space<vmem>>, vector<1x1x128xf32>
    %19 = vector.shape_cast %18 : vector<1x1x128xf32> to vector<1x128xf32>
    %20 = vector.broadcast %19 : vector<1x128xf32> to vector<8x128xf32>
    %21 = arith.mulf %17, %20 : vector<8x128xf32>
    %c0_9 = arith.constant 0 : index
    %c0_10 = arith.constant 0 : index
    %c0_11 = arith.constant 0 : index
    %22 = vector.load %arg4[%c0_9, %c0_10, %c0_11] : memref<1x1x128xf32, #tpu.memory_space<vmem>>, vector<1x1x128xf32>
    %23 = vector.shape_cast %22 : vector<1x1x128xf32> to vector<1x128xf32>
    %24 = vector.broadcast %23 : vector<1x128xf32> to vector<8x128xf32>
    %25 = arith.addf %21, %24 : vector<8x128xf32>
    %c0_12 = arith.constant 0 : index
    %c0_13 = arith.constant 0 : index
    %c0_14 = arith.constant 0 : index
    %26 = vector.load %arg5[%c0_12, %c0_13, %c0_14] : memref<1x8x128xf32, #tpu.memory_space<vmem>>, vector<1x8x128xf32>
    %27 = vector.shape_cast %26 : vector<1x8x128xf32> to vector<8x128xf32>
    %28 = vector.shape_cast %25 : vector<8x128xf32> to vector<1x8x128xf32>
    tpu.vector_store %arg5[%c0_12, %c0_13, %c0_14], %28 {strides = array<i32>} : memref<1x8x128xf32, #tpu.memory_space<vmem>>, vector<1x8x128xf32>,
    return
  }
  func.func @transform_0(%arg0: i32, %arg1: i32) -> (i32, i32, i32) {
    %c0_i32 = arith.constant 0 : i32
    %c0_i32_0 = arith.constant 0 : i32
    return %arg0, %arg1, %c0_i32 : i32, i32, i32
  }
  func.func @transform_1(%arg0: i32, %arg1: i32) -> (i32, i32, i32) {
    %c0_i32 = arith.constant 0 : i32
    %c0_i32_0 = arith.constant 0 : i32
    %c0_i32_1 = arith.constant 0 : i32
    return %arg0, %c0_i32, %c0_i32_0 : i32, i32, i32
  }
  func.func @transform_2(%arg0: i32, %arg1: i32) -> (i32, i32, i32) {
    %c0_i32 = arith.constant 0 : i32
    %c0_i32_0 = arith.constant 0 : i32
    %c0_i32_1 = arith.constant 0 : i32
    return %arg0, %c0_i32, %c0_i32_0 : i32, i32, i32
  }
  func.func @transform_3(%arg0: i32, %arg1: i32) -> (i32, i32, i32) {
    %c0_i32 = arith.constant 0 : i32
    %c0_i32_0 = arith.constant 0 : i32
    return %arg0, %arg1, %c0_i32 : i32, i32, i32
  }
}

</mosaic_0001>

<llo_original>
// kernel: tpu_custom_call.1
$region0: #{tpu_custom_call.1}
  #allocation0 [shape = 'u32[]', space=smem, size = 0x4, offset = 0x4, fixed_abs, tag = 'smem constant byte address 0x4 - core index']
  #allocation1 [shape = 'u32[144,128]{1,0:T(1,128)}', space=vmem, size = 0x12000, scoped, tag = 'internal scratch']
  %s0 = inlined_call_operand.hbm [shape: f32[2,32,128], index: 0, kind: input, shape index: {}]
  %s1 = inlined_call_operand.vmem [shape: f32[2,1,128], index: 1, kind: input, shape index: {}]
  %s2 = inlined_call_operand.vmem [shape: f32[2,1,128], index: 2, kind: input, shape index: {}]
  %s3 = inlined_call_operand.hbm [shape: f32[2,32,128], index: 3, kind: output, shape index: {}]
  %s4 = sld [smem:[#allocation0]]
  $region49: #{tpu_custom_call.1} parent=0
    _
  %s6 = ssub.s32 1, %s4
  %s7 = scalar_select 0, %s6, %s4
  $region1: #{tpu_custom_call.1} parent=0
    #allocation2 [shape = 'u8[8192]{0}', space=vmem, size = 0x2000, scoped, tag = 'input window, operand 0']
    #allocation3 [shape = 's32[2]{0}', space=sflag, size = 0x8, scoped, tag = 'scoped memory for tpu_custom_call.1']
    #allocation4 [shape = 's32[2]{0}', space=sflag, size = 0x8, scoped, tag = 'scoped memory for tpu_custom_call.1']
    #allocation5 [shape = 'u8[8192]{0}', space=vmem, size = 0x2000, scoped, tag = 'output window, operand 0']
    %8 = vsyncpa [#allocation3], 0
    %s9 = scalar_lea.sflag [#allocation3], 1
    %10 = vsyncpa %s9, 0
    %11 = vsyncpa [#allocation4], 0
    %s12 = scalar_lea.sflag [#allocation4], 1
    %13 = vsyncpa %s12, 0
    loop: start=0, step=1, limit=10
    $region2: #{tpu_custom_call.1} parent=1 // loop_pre_header
      _
    $region3: #{tpu_custom_call.1} parent=1 // loop_header
      %s15 = sphi 0, %s19
      %p16 = scmp.ge.s32.totalorder %s15, 10
      %s22 = sphi 0, %s34
      %s23 = sphi 0, %s30
      %s24 = sphi 0, %s22
      %s25 = sphi 0, %s23
      %s26 = sphi 0, %s24
      %s27 = sphi 0, %s25
      %s39 = sphi 0, %s41
      %s42 = sphi 0, %s39
      %s43 = sphi 0, %s42
      %s59 = sphi 0, %s43
      %s65 = sphi 0, %s67
      %s68 = sphi 0, %s65
      %s69 = sphi 0, %s68
      %s85 = sphi 0, %s69
      %s91 = sphi 0, %s93
      %s94 = sphi 0, %s91
      %s95 = sphi 0, %s94
      %s111 = sphi 0, %s95
      %s119 = sphi 0, %s121
      %s122 = sphi 0, %s119
      %s123 = sphi 0, %s122
      %s139 = sphi 0, %s123
    $region4: #{tpu_custom_call.1} parent=1 // loop_header_branch
      %18 = sbr.rel (%p16) target = $region8
    $region5: #{tpu_custom_call.1} parent=1 // loop_body
      %s20 = ssub.s32 %s15, 1
      %s21 = ssub.s32 %s15, 2
      %s28 = sadd.s32 1, %s23
      %p29 = scmp.ge.s32.totalorder %s28, 4
      %s30 = scalar_select %p29, 0, %s28
      %s31 = sadd.s32 1, %s22
      %s32 = scalar_select %p29, %s31, %s22
      %p33 = scmp.ge.s32.totalorder %s32, 2
      %s34 = scalar_select %p33, 0, %s32
      %s35 = ssub.s32 %s22, %s34
      %s36 = ssub.s32 %s23, %s30
      %s37 = sor.u32 %s35, %s36
      %p38 = scmp.eq.s32.totalorder %s37, 0
      %s40 = sadd.s32 %s39, 1
      %s41 = scalar_select %p38, %s39, %s40
      %p44 = pneg %p38
      %p45 = scmp.eq.s32.totalorder %s15, 7
      %p46 = por %p44, %p45
      %p47 = scmp.ne.s32.totalorder %s39, %s42
      %p48 = scmp.eq.s32.totalorder %s15, 0
      %p49 = por %p47, %p48
      %p50 = scmp.ne.s32.totalorder %s39, %s42
      %p51 = scmp.eq.s32.totalorder %s20, 7
      %p52 = por %p50, %p51
      %p53 = scmp.ne.s32.totalorder %s42, %s43
      %p54 = scmp.eq.s32.totalorder %s20, 0
      %p55 = por %p53, %p54
      %p56 = scmp.ne.s32.totalorder %s42, %s43
      %p57 = scmp.eq.s32.totalorder %s21, 7
      %p58 = por %p56, %p57
      %p60 = scmp.ne.s32.totalorder %s43, %s59
      %p61 = scmp.eq.s32.totalorder %s21, 0
      %p62 = por %p60, %p61
      %s63 = ssub.s32 %s22, %s34
      %p64 = scmp.eq.s32.totalorder %s63, 0
      %s66 = sadd.s32 %s65, 1
      %s67 = scalar_select %p64, %s65, %s66
      %p70 = pneg %p64
      %p71 = scmp.eq.s32.totalorder %s15, 7
      %p72 = por %p70, %p71
      %p73 = scmp.ne.s32.totalorder %s65, %s68
      %p74 = scmp.eq.s32.totalorder %s15, 0
      %p75 = por %p73, %p74
      %p76 = scmp.ne.s32.totalorder %s65, %s68
      %p77 = scmp.eq.s32.totalorder %s20, 7
      %p78 = por %p76, %p77
      %p79 = scmp.ne.s32.totalorder %s68, %s69
      %p80 = scmp.eq.s32.totalorder %s20, 0
      %p81 = por %p79, %p80
      %p82 = scmp.ne.s32.totalorder %s68, %s69
      %p83 = scmp.eq.s32.totalorder %s21, 7
      %p84 = por %p82, %p83
      %p86 = scmp.ne.s32.totalorder %s69, %s85
      %p87 = scmp.eq.s32.totalorder %s21, 0
      %p88 = por %p86, %p87
      %s89 = ssub.s32 %s22, %s34
      %p90 = scmp.eq.s32.totalorder %s89, 0
      %s92 = sadd.s32 %s91, 1
      %s93 = scalar_select %p90, %s91, %s92
      %p96 = pneg %p90
      %p97 = scmp.eq.s32.totalorder %s15, 7
      %p98 = por %p96, %p97
      %p99 = scmp.ne.s32.totalorder %s91, %s94
      %p100 = scmp.eq.s32.totalorder %s15, 0
      %p101 = por %p99, %p100
      %p102 = scmp.ne.s32.totalorder %s91, %s94
      %p103 = scmp.eq.s32.totalorder %s20, 7
      %p104 = por %p102, %p103
      %p105 = scmp.ne.s32.totalorder %s94, %s95
      %p106 = scmp.eq.s32.totalorder %s20, 0
      %p107 = por %p105, %p106
      %p108 = scmp.ne.s32.totalorder %s94, %s95
      %p109 = scmp.eq.s32.totalorder %s21, 7
      %p110 = por %p108, %p109
      %p112 = scmp.ne.s32.totalorder %s95, %s111
      %p113 = scmp.eq.s32.totalorder %s21, 0
      %p114 = por %p112, %p113
      %s115 = ssub.s32 %s22, %s34
      %s116 = ssub.s32 %s23, %s30
      %s117 = sor.u32 %s115, %s116
      %p118 = scmp.eq.s32.totalorder %s117, 0
      %s120 = sadd.s32 %s119, 1
      %s121 = scalar_select %p118, %s119, %s120
      %p124 = pneg %p118
      %p125 = scmp.eq.s32.totalorder %s15, 7
      %p126 = por %p124, %p125
      %p127 = scmp.ne.s32.totalorder %s119, %s122
      %p128 = scmp.eq.s32.totalorder %s15, 0
      %p129 = por %p127, %p128
      %p130 = scmp.ne.s32.totalorder %s119, %s122
      %p131 = scmp.eq.s32.totalorder %s20, 7
      %p132 = por %p130, %p131
      %p133 = scmp.ne.s32.totalorder %s122, %s123
      %p134 = scmp.eq.s32.totalorder %s20, 0
      %p135 = por %p133, %p134
      %p136 = scmp.ne.s32.totalorder %s122, %s123
      %p137 = scmp.eq.s32.totalorder %s21, 7
      %p138 = por %p136, %p137
      %p140 = scmp.ne.s32.totalorder %s123, %s139
      %p141 = scmp.eq.s32.totalorder %s21, 0
      %p142 = por %p140, %p141
      %p143 = scmp.le.s32.totalorder 1, %s15
      %p144 = scmp.lt.s32.totalorder %s15, 9
      %p145 = pnand %p143, %p144
      %p146 = pneg %p145
      // Predicated region
      $region9: #{tpu_custom_call.1} parent=5 // pred_check
        _
      $region10: #{tpu_custom_call.1} parent=5 // pred_check_branch
        %148 = sbr.rel (%p145) target = $region12
      $region11: #{tpu_custom_call.1} parent=5 // pred_region
        %s149 = ssub.s32 %s15, 1
      $region12: #{tpu_custom_call.1} parent=5 // pred_fallthru
        _
      %p150 = scmp.lt.s32.totalorder %s15, 8
      // Predicated region
      $region13: #{tpu_custom_call.1} parent=5 // pred_check
        %p151 = pneg %p150
      $region14: #{tpu_custom_call.1} parent=5 // pred_check_branch
        %153 = sbr.rel (%p151) target = $region16
      $region15: #{tpu_custom_call.1} parent=5 // pred_region
        // Predicated region
        $region17: #{tpu_custom_call.1} parent=15 // pred_check
          %p154 = pneg %p49
        $region18: #{tpu_custom_call.1} parent=15 // pred_check_branch
          %156 = sbr.rel (%p154) target = $region20
        $region19: #{tpu_custom_call.1} parent=15 // pred_region
          %s157 = sand.u32 %s39, 1
          %s158 = scalar_lea.sflag [#allocation3], %s157
          %s159 = sand.u32 %s39, 1
          %s160 = smul.addr %s159, 8
          %s161 = scalar_lea.vmem [#allocation2], %s160
          %s163 = ssub.s32 128, 128
          %164 = vsyncadd %s158, %s163
          %s165 = smul.addr %s22, 4
          %s166 = sadd.s32 %s23, %s165
          %s167 = smul.addr %s166, 128
          %s168 = scalar_lea.hbm %s0, %s167
          %s170 = sshll.u32 %s161, 4
          %s171 = int_to_ptr.vmem [resolvable:$true] %s170
          %173 = dma.hbm_to_vmem [thread:$0]  %s168, 128, %s171, %s158
        $region20: #{tpu_custom_call.1} parent=15 // pred_fallthru
          _
        // Predicated region
        $region21: #{tpu_custom_call.1} parent=15 // pred_check
          %p174 = pneg %p75
        $region22: #{tpu_custom_call.1} parent=15 // pred_check_branch
          %176 = sbr.rel (%p174) target = $region24
        $region23: #{tpu_custom_call.1} parent=15 // pred_region
          %p177 = scmp.lt.s32.totalorder %s22, 1
          %s178 = scalar_select %p177, %s22, 1
          %s179 = scalar_lea.vmem %s1, %s178
        $region24: #{tpu_custom_call.1} parent=15 // pred_fallthru
          _
        // Predicated region
        $region25: #{tpu_custom_call.1} parent=15 // pred_check
          %p180 = pneg %p101
        $region26: #{tpu_custom_call.1} parent=15 // pred_check_branch
          %182 = sbr.rel (%p180) target = $region28
        $region27: #{tpu_custom_call.1} parent=15 // pred_region
          %p183 = scmp.lt.s32.totalorder %s22, 1
          %s184 = scalar_select %p183, %s22, 1
          %s185 = scalar_lea.vmem %s2, %s184
        $region28: #{tpu_custom_call.1} parent=15 // pred_fallthru
          _
      $region16: #{tpu_custom_call.1} parent=5 // pred_fallthru
        _
      %p186 = scmp.le.s32.totalorder 1, %s15
      %p187 = scmp.lt.s32.totalorder %s15, 9
      %p188 = pnand %p186, %p187
      %p189 = pneg %p188
      // Predicated region
      $region29: #{tpu_custom_call.1} parent=5 // pred_check
        _
      $region30: #{tpu_custom_call.1} parent=5 // pred_check_branch
        %191 = sbr.rel (%p188) target = $region32
      $region31: #{tpu_custom_call.1} parent=5 // pred_region
        %s192 = ssub.s32 %s15, 1
        %s193 = sand.u32 %s42, 1
        %s194 = scalar_lea.sflag [#allocation3], %s193
        %s195 = sand.u32 %s42, 1
        %s196 = smul.addr %s195, 8
        %s197 = scalar_lea.vmem [#allocation2], %s196
        // Predicated region
        $region33: #{tpu_custom_call.1} parent=31 // pred_check
          %p198 = pneg %p55
        $region34: #{tpu_custom_call.1} parent=31 // pred_check_branch
          %200 = sbr.rel (%p198) target = $region36
        $region35: #{tpu_custom_call.1} parent=31 // pred_region
          %201 = dma.done %s194, 128
        $region36: #{tpu_custom_call.1} parent=31 // pred_fallthru
          _
        %s202 = sand.u32 %s42, 1
        %s203 = scalar_lea.sflag [#allocation3], %s202
        %s204 = sand.u32 %s42, 1
        %s205 = smul.addr %s204, 8
        %s206 = scalar_lea.vmem [#allocation2], %s205
        %p207 = pneg %p55
        %p208 = pneg %p52
        %p209 = scmp.lt.s32.totalorder %s24, 1
        %s210 = scalar_select %p209, %s24, 1
        %s211 = scalar_lea.vmem %s1, %s210
        %p212 = pneg %p81
        %p213 = pneg %p78
        %p214 = scmp.lt.s32.totalorder %s24, 1
        %s215 = scalar_select %p214, %s24, 1
        %s216 = scalar_lea.vmem %s2, %s215
        %p217 = pneg %p107
        %p218 = pneg %p104
        %p219 = pneg %p135
        %p220 = pneg %p132
        %s221 = sand.u32 %s122, 1
        %s222 = scalar_lea.sflag [#allocation4], %s221
        %s223 = sand.u32 %s122, 1
        %s224 = smul.addr %s223, 8
        %s225 = scalar_lea.vmem [#allocation5], %s224
        %p226 = scmp.lt.s32.totalorder %s24, 1
        %s227 = scalar_select %p226, %s24, 1
        %s228 = scalar_lea.vmem %s1, %s227
        %p229 = scmp.lt.s32.totalorder %s24, 1
        %s230 = scalar_select %p229, %s24, 1
        %s231 = scalar_lea.vmem %s2, %s230
        %v232 = vld [vmem:[%s197] sm:$0xff]
        %233 = vadd.xlane.f32.xlu0 %v232
        %v234 = vpop.xlane.xlu0 %233
        %v235 = vrcp.pop 128.0
        %v236 = vmul.f32 %v234, %v235
        %v237 = vsub.f32 %v232, %v236
        %v238 = vmul.f32 %v237, %v237
        %239 = vadd.xlane.f32.xlu0 %v238
        %v240 = vpop.xlane.xlu0 %239
        %v241 = vmul.f32 %v240, %v235
        %v242 = vadd.f32 %v241, 1e-05
        %v243 = vrsqrt.pop %v242
        %v244 = vmul.f32 %v237, %v243
        %v245 = vld [vmem:[%s228] sm:$0x1]
        %v247 = vlaneseq
        %v248 = vshrl.u32 %v247, 7
        %v249 = vsub.s32 0, %v248
        %v250 = vrot.slane %v245, %v249
        %v252 = vmul.f32 %v244, %v250
        %v253 = vld [vmem:[%s231] sm:$0x1]
        %v255 = vlaneseq
        %v256 = vshrl.u32 %v255, 7
        %v257 = vsub.s32 0, %v256
        %v258 = vrot.slane %v253, %v257
        %v260 = vadd.f32 %v252, %v258
        %261 = vst [vmem:[%s225] sm:$0xff] %v260
        %s262 = sand.u32 %s122, 1
        %s263 = scalar_lea.sflag [#allocation4], %s262
        %s264 = sand.u32 %s122, 1
        %s265 = smul.addr %s264, 8
        %s266 = scalar_lea.vmem [#allocation5], %s265
        // Predicated region
        $region37: #{tpu_custom_call.1} parent=31 // pred_check
          %p267 = pneg %p132
        $region38: #{tpu_custom_call.1} parent=31 // pred_check_branch
          %269 = sbr.rel (%p267) target = $region40
        $region39: #{tpu_custom_call.1} parent=31 // pred_region
          %s271 = ssub.s32 128, 128
          %272 = vsyncadd %s263, %s271
          %s273 = smul.addr %s24, 4
          %s274 = sadd.s32 %s25, %s273
          %s275 = smul.addr %s274, 128
          %s276 = scalar_lea.hbm %s3, %s275
          %s278 = sshll.u32 %s266, 4
          %s279 = int_to_ptr.vmem [resolvable:$true] %s278
          %281 = dma.vmem_to_hbm [thread:$0]  %s279, 128, %s276, %s263
        $region40: #{tpu_custom_call.1} parent=31 // pred_fallthru
          _
      $region32: #{tpu_custom_call.1} parent=5 // pred_fallthru
        _
      %p282 = scmp.le.s32.totalorder 2, %s15
      // Predicated region
      $region41: #{tpu_custom_call.1} parent=5 // pred_check
        %p283 = pneg %p282
      $region42: #{tpu_custom_call.1} parent=5 // pred_check_branch
        %285 = sbr.rel (%p283) target = $region44
      $region43: #{tpu_custom_call.1} parent=5 // pred_region
        %s286 = ssub.s32 %s15, 2
        // Predicated region
        $region45: #{tpu_custom_call.1} parent=43 // pred_check
          %p287 = pneg %p138
        $region46: #{tpu_custom_call.1} parent=43 // pred_check_branch
          %289 = sbr.rel (%p287) target = $region48
        $region47: #{tpu_custom_call.1} parent=43 // pred_region
          %s290 = sand.u32 %s123, 1
          %s291 = scalar_lea.sflag [#allocation4], %s290
          %s292 = sand.u32 %s123, 1
          %s293 = smul.addr %s292, 8
          %s294 = scalar_lea.vmem [#allocation5], %s293
          %295 = dma.done %s291, 128
        $region48: #{tpu_custom_call.1} parent=43 // pred_fallthru
          _
      $region44: #{tpu_custom_call.1} parent=5 // pred_fallthru
        _
    $region6: #{tpu_custom_call.1} parent=1 // loop_footer
      %s19 = sadd.s32 1, %s15
    $region7: #{tpu_custom_call.1} parent=1 // loop_footer_branch
      %14 = sbr.rel target = $region3
    $region8: #{tpu_custom_call.1} parent=1 // loop_exit
      _
    %296 = vsyncpa [#allocation3], 1
    %s297 = scalar_lea.sflag [#allocation3], 1
    %298 = vsyncpa %s297, 1
    %299 = vsyncpa [#allocation4], 1
    %s300 = scalar_lea.sflag [#allocation4], 1
    %301 = vsyncpa %s300, 1

</llo_original>
